<compile_context>
chip_gen: v7x
topology: tpu7x:2x2x1
jax: 0.10.0
libtpu: 0.0.40
codegen_flags: <defaults>
</compile_context>

<pallas_src>
import math

import jax
import jax.numpy as jnp
from jax.experimental import pallas as pl
from jax.experimental.pallas import tpu as pltpu

_LANE = 128        # vreg lane width
_SUBLANE = 8       # vreg sublane count
_TILE_B_MAX = 512  # batch tile; sized well under the 16/32 MiB scoped VMEM defaults


def _round_up(n, m):
    return ((n + m - 1) // m) * m


# ---------------------------------------------------------------------------
# Kernel
# ---------------------------------------------------------------------------
def _prnn_kernel(x_ref, w_ff_ref, b_ff_ref, w_head_ref, b_head_ref,
                 mu_ref, logvar_ref):
    x = x_ref[...]

    # fc_ff1 + leaky_relu (negative_slope = 0.01, F.leaky_relu default)
    h = jnp.dot(x, w_ff_ref[...], preferred_element_type=jnp.float32) + b_ff_ref[...]
    h = jnp.where(h >= 0, h, 0.01 * h)

    # fused head: [fc_mu | fc_var] -> single lane-dense matmul + lane-dense stores
    head = (jnp.dot(h.astype(w_head_ref.dtype), w_head_ref[...],
                    preferred_element_type=jnp.float32) + b_head_ref[...])
    out_pad = mu_ref.shape[-1]                    # static (multiple of 128)
    mu_ref[...] = jnp.tanh(head[:, :out_pad]).astype(mu_ref.dtype)
    logvar_ref[...] = head[:, out_pad:].astype(logvar_ref.dtype)


# ---------------------------------------------------------------------------
# Parameter preparation (host side, done once)
# ---------------------------------------------------------------------------
def prepare_params(w_ff, b_ff, w_mu, b_mu, w_var, b_var, compute_dtype=jnp.float32):
    """Pad hidden/output dims to the 128-lane width and fuse the mu/var heads.

    Weights are laid out (in_features, out_features) so the kernel runs plain x @ W.
    `compute_dtype` may be set to jnp.bfloat16 on v6e/v7x to halve HBM weight traffic
    (accumulation stays f32 via preferred_element_type); default keeps f32 so results
    match the float32 reference bit-for-bit within normal tolerance.
    """
    input_dim, hidden_dim = w_ff.shape
    output_dim = w_mu.shape[1]
    hid_pad = _round_up(hidden_dim, _LANE)
    out_pad = _round_up(output_dim, _LANE)

    w_ff_p = jnp.zeros((input_dim, hid_pad), compute_dtype)
    w_ff_p = w_ff_p.at[:, :hidden_dim].set(w_ff.astype(compute_dtype))
    b_ff_p = jnp.zeros((1, hid_pad), jnp.float32)
    b_ff_p = b_ff_p.at[:, :hidden_dim].set(b_ff.reshape(1, -1).astype(jnp.float32))

    w_head = jnp.zeros((hid_pad, 2 * out_pad), compute_dtype)
    w_head = w_head.at[:hidden_dim, :output_dim].set(w_mu.astype(compute_dtype))
    w_head = w_head.at[:hidden_dim, out_pad:out_pad + output_dim].set(
        w_var.astype(compute_dtype))
    b_head = jnp.zeros((1, 2 * out_pad), jnp.float32)
    b_head = b_head.at[:, :output_dim].set(b_mu.reshape(1, -1).astype(jnp.float32))
    b_head = b_head.at[:, out_pad:out_pad + output_dim].set(
        b_var.reshape(1, -1).astype(jnp.float32))

    return {
        "w_ff": w_ff_p, "b_ff": b_ff_p, "w_head": w_head, "b_head": b_head,
        "input_dim": input_dim, "hidden_dim": hidden_dim, "output_dim": output_dim,
        "hid_pad": hid_pad, "out_pad": out_pad, "compute_dtype": compute_dtype,
    }


# ---------------------------------------------------------------------------
# Forward wrapper
# ---------------------------------------------------------------------------
def base_prnn_forward(x, packed):
    """Fused forward pass. x: (B, input_dim). Returns (tanh(mu), logvar) in float32."""
    compute_dtype = packed["compute_dtype"]
    input_dim = packed["input_dim"]
    output_dim = packed["output_dim"]
    hid_pad = packed["hid_pad"]
    out_pad = packed["out_pad"]

    B = x.shape[0]
    tile_b = min(_TILE_B_MAX, _round_up(B, _SUBLANE))
    B_pad = _round_up(B, tile_b)

    x_p = x.astype(compute_dtype)
    if B_pad != B:
        x_p = jnp.pad(x_p, ((0, B_pad - B), (0, 0)))

    grid = (pl.cdiv(B_pad, tile_b),)

    itemsize = jnp.dtype(compute_dtype).itemsize
    cost = pl.CostEstimate(
        flops=2 * B_pad * (input_dim * hid_pad + hid_pad * 2 * out_pad),
        transcendentals=B_pad * out_pad,                         # tanh
        bytes_accessed=(B_pad * input_dim * itemsize             # x
                        + (input_dim * hid_pad + hid_pad * 2 * out_pad) * itemsize  # W
                        + (hid_pad + 2 * out_pad) * 4            # biases
                        + 2 * B_pad * out_pad * 4),              # mu, logvar
    )

    mu, logvar = pl.pallas_call(
        _prnn_kernel,
        out_shape=(jax.ShapeDtypeStruct((B_pad, out_pad), jnp.float32),
                   jax.ShapeDtypeStruct((B_pad, out_pad), jnp.float32)),
        grid=grid,
        in_specs=[
            pl.BlockSpec((tile_b, input_dim), lambda i: (i, 0)),       # x: tiled over batch
            pl.BlockSpec((input_dim, hid_pad), lambda i: (0, 0)),      # W_ff: resident
            pl.BlockSpec((1, hid_pad), lambda i: (0, 0)),              # b_ff: resident
            pl.BlockSpec((hid_pad, 2 * out_pad), lambda i: (0, 0)),    # W_head: resident
            pl.BlockSpec((1, 2 * out_pad), lambda i: (0, 0)),          # b_head: resident
        ],
        out_specs=(pl.BlockSpec((tile_b, out_pad), lambda i: (i, 0)),
                   pl.BlockSpec((tile_b, out_pad), lambda i: (i, 0))),
        compiler_params=pltpu.CompilerParams(dimension_semantics=("parallel",)),
        cost_estimate=cost,
    )(x_p, packed["w_ff"], packed["b_ff"], packed["w_head"], packed["b_head"])

    return mu[:B, :output_dim], logvar[:B, :output_dim]


def prepare_input(x, num_rec_layers=0):
    """Mirror BasePRNN.prepare_input (torch squeeze(0) is a no-op when dim0 != 1)."""
    if num_rec_layers:
        if x.ndim == 2:
            x = x[None, ...]
    elif x.ndim == 3 and x.shape[0] == 1:
        x = x[0]
    return x


def base_prnn_apply(packed, *args):
    """Mirror BasePRNN.forward: concat prepared inputs along last dim, run fused kernel."""
    x = jnp.concatenate([prepare_input(a) for a in args], axis=-1)
    lead = x.shape[:-1]
    mu, logvar = base_prnn_forward(x.reshape(-1, x.shape[-1]), packed)
    out_dim = mu.shape[-1]
    return mu.reshape(*lead, out_dim), logvar.reshape(*lead, out_dim)


# ---------------------------------------------------------------------------
# Init + reference
# ---------------------------------------------------------------------------
def init_params(key, input_dim, hidden_dim, output_dim):
    """nn.Linear default init (uniform +-1/sqrt(fan_in)); fc_mu/fc_var biases zeroed."""
    k1, k2, k3, k4 = jax.random.split(key, 4)

    def lin_w(k, fan_in, fan_out):
        bound = 1.0 / math.sqrt(fan_in)
        return jax.random.uniform(k, (fan_in, fan_out), jnp.float32, -bound, bound)

    w_ff = lin_w(k1, input_dim, hidden_dim)
    b_ff = jax.random.uniform(k2, (hidden_dim,), jnp.float32,
                              -1.0 / math.sqrt(input_dim), 1.0 / math.sqrt(input_dim))
    w_mu = lin_w(k3, hidden_dim, output_dim)
    b_mu = jnp.zeros((output_dim,), jnp.float32)       # nn.init.zeros_
    w_var = lin_w(k4, hidden_dim, output_dim)
    b_var = jnp.zeros((output_dim,), jnp.float32)      # nn.init.zeros_
    return (w_ff, b_ff, w_mu, b_mu, w_var, b_var)


def _reference(x, raw_params):
    w_ff, b_ff, w_mu, b_mu, w_var, b_var = raw_params
    h = x @ w_ff + b_ff
    h = jnp.where(h >= 0, h, 0.01 * h)
    mu = jnp.tanh(h @ w_mu + b_mu)
    logvar = h @ w_var + b_var
    return mu, logvar


if __name__ == "__main__":
    input_dim, hidden_dim, output_dim = 16, 32, 8
    batch = 8

    key = jax.random.PRNGKey(0)
    k_params, k_x = jax.random.split(key)
    raw_params = init_params(k_params, input_dim, hidden_dim, output_dim)
    packed = prepare_params(*raw_params)
    x = jax.random.normal(k_x, (batch, input_dim), jnp.float32)

    # single-input path (mirrors model(x))
    mu, logvar = base_prnn_apply(packed, x)
    jax.block_until_ready((mu, logvar))

    mu_ref, logvar_ref = _reference(x, raw_params)
    assert mu.shape == (batch, output_dim) and logvar.shape == (batch, output_dim)
    assert jnp.allclose(mu, mu_ref, atol=1e-5, rtol=1e-5)
    assert jnp.allclose(logvar, logvar_ref, atol=1e-5, rtol=1e-5)

    # multi-input path (mirrors model(a, b) -> concat along the last dim)
    mu2, logvar2 = base_prnn_apply(packed, x[:, :10], x[:, 10:])
    jax.block_until_ready((mu2, logvar2))
    assert jnp.allclose(mu2, mu_ref, atol=1e-5, rtol=1e-5)
    assert jnp.allclose(logvar2, logvar_ref, atol=1e-5, rtol=1e-5)

    print("KERNEL_OK")
</pallas_src>

<mosaic_0001>
module attributes {stable_mosaic.version = 11 : i64} {
  func.func @_prnn_kernel(%arg0: i32, %arg1: memref<8x16xf32, #tpu.memory_space<vmem>>, %arg2: memref<16x128xf32, #tpu.memory_space<vmem>>, %arg3: memref<1x128xf32, #tpu.memory_space<vmem>>, %arg4: memref<128x256xf32, #tpu.memory_space<vmem>>, %arg5: memref<1x256xf32, #tpu.memory_space<vmem>>, %arg6: memref<8x128xf32, #tpu.memory_space<vmem>>, %arg7: memref<8x128xf32, #tpu.memory_space<vmem>>) attributes {dimension_semantics = [#tpu.dimension_semantics<parallel>], iteration_bounds = array<i64: 1>, scalar_prefetch = 0 : i64, scratch_operands = 0 : i64, tpu.core_type = #tpu.core_type<tc>, window_params = [{transform_indices = @transform_0, window_bounds = array<i64: 8, 16>}, {pipeline_mode = #tpu.pipeline_mode<synchronous>, transform_indices = @transform_1, window_bounds = array<i64: 16, 128>}, {pipeline_mode = #tpu.pipeline_mode<synchronous>, transform_indices = @transform_2, window_bounds = array<i64: 1, 128>}, {pipeline_mode = #tpu.pipeline_mode<synchronous>, transform_indices = @transform_3, window_bounds = array<i64: 128, 256>}, {pipeline_mode = #tpu.pipeline_mode<synchronous>, transform_indices = @transform_4, window_bounds = array<i64: 1, 256>}, {transform_indices = @transform_5, window_bounds = array<i64: 8, 128>}, {transform_indices = @transform_6, window_bounds = array<i64: 8, 128>}]} {
    %c0 = arith.constant 0 : index
    %c0_0 = arith.constant 0 : index
    %0 = vector.load %arg1[%c0, %c0_0] : memref<8x16xf32, #tpu.memory_space<vmem>>, vector<8x16xf32>
    %c0_1 = arith.constant 0 : index
    %c0_2 = arith.constant 0 : index
    %1 = vector.load %arg2[%c0_1, %c0_2] : memref<16x128xf32, #tpu.memory_space<vmem>>, vector<16x128xf32>
    %cst = arith.constant dense<0.000000e+00> : vector<8x128xf32>
    %2 = tpu.matmul %0, %1, %cst {dimension_numbers = #tpu.dot_dimension_numbers<[1], [0], [0], [1], [0, 0, 1, 1], [], []>} : vector<8x16xf32>, vector<16x128xf32>, vector<8x128xf32> -> vector<8x128xf32>
    %c0_3 = arith.constant 0 : index
    %c0_4 = arith.constant 0 : index
    %3 = vector.load %arg3[%c0_3, %c0_4] : memref<1x128xf32, #tpu.memory_space<vmem>>, vector<1x128xf32>
    %4 = vector.broadcast %3 : vector<1x128xf32> to vector<8x128xf32>
    %5 = arith.addf %2, %4 : vector<8x128xf32>
    %cst_5 = arith.constant 0.000000e+00 : f32
    %6 = vector.broadcast %cst_5 : f32 to vector<8x128xf32>
    %7 = arith.cmpf oge, %5, %6 : vector<8x128xf32>
    %cst_6 = arith.constant 0.00999999977 : f32
    %8 = vector.broadcast %cst_6 : f32 to vector<8x128xf32>
    %9 = arith.mulf %8, %5 : vector<8x128xf32>
    %10 = arith.select %7, %5, %9 : vector<8x128xi1>, vector<8x128xf32>
    %c0_7 = arith.constant 0 : index
    %c0_8 = arith.constant 0 : index
    %11 = vector.load %arg4[%c0_7, %c0_8] : memref<128x256xf32, #tpu.memory_space<vmem>>, vector<128x256xf32>
    %cst_9 = arith.constant dense<0.000000e+00> : vector<8x256xf32>
    %12 = tpu.matmul %10, %11, %cst_9 {dimension_numbers = #tpu.dot_dimension_numbers<[1], [0], [0], [1], [0, 0, 1, 1], [], []>} : vector<8x128xf32>, vector<128x256xf32>, vector<8x256xf32> -> vector<8x256xf32>
    %c0_10 = arith.constant 0 : index
    %c0_11 = arith.constant 0 : index
    %13 = vector.load %arg5[%c0_10, %c0_11] : memref<1x256xf32, #tpu.memory_space<vmem>>, vector<1x256xf32>
    %14 = vector.broadcast %13 : vector<1x256xf32> to vector<8x256xf32>
    %15 = arith.addf %12, %14 : vector<8x256xf32>
    %16 = vector.extract_strided_slice %15 {offsets = [0, 0], sizes = [8, 128], strides = [1, 1]} : vector<8x256xf32> to vector<8x128xf32>
    %17 = math.tanh %16 : vector<8x128xf32>
    %c0_12 = arith.constant 0 : index
    %c0_13 = arith.constant 0 : index
    %18 = vector.load %arg6[%c0_12, %c0_13] : memref<8x128xf32, #tpu.memory_space<vmem>>, vector<8x128xf32>
    tpu.vector_store %arg6[%c0_12, %c0_13], %17 {strides = array<i32>} : memref<8x128xf32, #tpu.memory_space<vmem>>, vector<8x128xf32>,
    %19 = vector.extract_strided_slice %15 {offsets = [0, 128], sizes = [8, 128], strides = [1, 1]} : vector<8x256xf32> to vector<8x128xf32>
    %c0_14 = arith.constant 0 : index
    %c0_15 = arith.constant 0 : index
    %20 = vector.load %arg7[%c0_14, %c0_15] : memref<8x128xf32, #tpu.memory_space<vmem>>, vector<8x128xf32>
    tpu.vector_store %arg7[%c0_14, %c0_15], %19 {strides = array<i32>} : memref<8x128xf32, #tpu.memory_space<vmem>>, vector<8x128xf32>,
    return
  }
  func.func @transform_0(%arg0: i32) -> (i32, i32) {
    %c0_i32 = arith.constant 0 : i32
    %c0_i32_0 = arith.constant 0 : i32
    return %arg0, %c0_i32 : i32, i32
  }
  func.func @transform_1(%arg0: i32) -> (i32, i32) {
    %c0_i32 = arith.constant 0 : i32
    %c0_i32_0 = arith.constant 0 : i32
    %c0_i32_1 = arith.constant 0 : i32
    return %c0_i32, %c0_i32_0 : i32, i32
  }
  func.func @transform_2(%arg0: i32) -> (i32, i32) {
    %c0_i32 = arith.constant 0 : i32
    %c0_i32_0 = arith.constant 0 : i32
    %c0_i32_1 = arith.constant 0 : i32
    return %c0_i32, %c0_i32_0 : i32, i32
  }
  func.func @transform_3(%arg0: i32) -> (i32, i32) {
    %c0_i32 = arith.constant 0 : i32
    %c0_i32_0 = arith.constant 0 : i32
    %c0_i32_1 = arith.constant 0 : i32
    return %c0_i32, %c0_i32_0 : i32, i32
  }
  func.func @transform_4(%arg0: i32) -> (i32, i32) {
    %c0_i32 = arith.constant 0 : i32
    %c0_i32_0 = arith.constant 0 : i32
    %c0_i32_1 = arith.constant 0 : i32
    return %c0_i32, %c0_i32_0 : i32, i32
  }
  func.func @transform_5(%arg0: i32) -> (i32, i32) {
    %c0_i32 = arith.constant 0 : i32
    %c0_i32_0 = arith.constant 0 : i32
    return %arg0, %c0_i32 : i32, i32
  }
  func.func @transform_6(%arg0: i32) -> (i32, i32) {
    %c0_i32 = arith.constant 0 : i32
    %c0_i32_0 = arith.constant 0 : i32
    return %arg0, %c0_i32 : i32, i32
  }
}

</mosaic_0001>

<llo_original>
// kernel: tpu_custom_call.1
$region0: #{tpu_custom_call.1}
  #allocation0 [shape = 'u32[]', space=smem, size = 0x4, offset = 0x4, fixed_abs, tag = 'smem constant byte address 0x4 - core index']
  #allocation1 [shape = 'u32[144,128]{1,0:T(1,128)}', space=vmem, size = 0x12000, scoped, tag = 'internal scratch']
  %s0 = inlined_call_operand.hbm [shape: f32[8,16], index: 0, kind: input, shape index: {}]
  %s1 = inlined_call_operand.hbm [shape: f32[16,128], index: 1, kind: input, shape index: {}]
  %s2 = inlined_call_operand.vmem [shape: f32[1,128], index: 2, kind: input, shape index: {}]
  %s3 = inlined_call_operand.hbm [shape: f32[128,256], index: 3, kind: input, shape index: {}]
  %s4 = inlined_call_operand.vmem [shape: f32[1,256], index: 4, kind: input, shape index: {}]
  %s5 = inlined_call_operand.hbm [shape: f32[8,128], index: 5, kind: output, shape index: {0}]
  %s6 = inlined_call_operand.hbm [shape: f32[8,128], index: 6, kind: output, shape index: {1}]
  %7 = xla_tuple %s5, %s6
  %s8 = sld [smem:[#allocation0]]
  $region50: #{tpu_custom_call.1} parent=0
    _
  %s10 = ssub.s32 1, %s8
  %s11 = scalar_select 0, %s10, %s8
  $region1: #{tpu_custom_call.1} parent=0
    #allocation2 [shape = 'u8[4096]{0}', space=vmem, size = 0x1000, scoped, tag = 'input window, operand 0, single buffered']
    #allocation3 [shape = 's32[1]{0}', space=sflag, size = 0x4, scoped, tag = 'scoped memory for tpu_custom_call.1']
    #allocation4 [shape = 's32[1]{0}', space=sflag, size = 0x4, scoped, tag = 'scoped memory for tpu_custom_call.1']
    #allocation5 [shape = 'u8[8192]{0}', space=vmem, size = 0x2000, scoped, tag = 'input window, operand 1, single buffered']
    #allocation6 [shape = 's32[1]{0}', space=sflag, size = 0x4, scoped, tag = 'scoped memory for tpu_custom_call.1']
    #allocation7 [shape = 'u8[131072]{0}', space=vmem, size = 0x20000, scoped, tag = 'input window, operand 3, single buffered']
    #allocation8 [shape = 'u8[4096]{0}', space=vmem, size = 0x1000, scoped, tag = 'output window, operand 0, single buffered']
    #allocation9 [shape = 'u8[4096]{0}', space=vmem, size = 0x1000, scoped, tag = 'output window, operand 1, single buffered']
    #allocation10 [shape = 's32[1]{0}', space=sflag, size = 0x4, scoped, tag = 'scoped memory for tpu_custom_call.1']
    %12 = vsyncpa [#allocation3], 0
    %13 = vsyncpa [#allocation6], 0
    %14 = vsyncpa [#allocation4], 0
    %15 = vsyncpa [#allocation10], 0
    // Predicated region
    $region2: #{tpu_custom_call.1} parent=1 // pred_check
      _
    $region3: #{tpu_custom_call.1} parent=1 // pred_check_branch
      %17 = sbr.rel (0) target = $region5
    $region4: #{tpu_custom_call.1} parent=1 // pred_region
      %s19 = ssub.s32 128, 128
      %20 = vsyncadd [#allocation3], %s19
      %s22 = sshll.u32 [#allocation2], 4
      %s23 = int_to_ptr.vmem [resolvable:$true] %s22
      %25 = dma.hbm_to_vmem [thread:$0]  %s0, 128, %s23, [#allocation3]
    $region5: #{tpu_custom_call.1} parent=1 // pred_fallthru
      _
    // Predicated region
    $region6: #{tpu_custom_call.1} parent=1 // pred_check
      _
    $region7: #{tpu_custom_call.1} parent=1 // pred_check_branch
      %27 = sbr.rel (0) target = $region9
    $region8: #{tpu_custom_call.1} parent=1 // pred_region
      %s29 = ssub.s32 256, 256
      %30 = vsyncadd [#allocation6], %s29
      %s31 = sshll.u32 [#allocation5], 4
      %s32 = int_to_ptr.vmem [resolvable:$true] %s31
      %37 = dma.hbm_to_vmem [thread:$0]  %s1, 256, %s32, [#allocation6], 128, 128, 8
    $region9: #{tpu_custom_call.1} parent=1 // pred_fallthru
      _
    // Predicated region
    $region10: #{tpu_custom_call.1} parent=1 // pred_check
      _
    $region11: #{tpu_custom_call.1} parent=1 // pred_check_branch
      %39 = sbr.rel (0) target = $region13
    $region12: #{tpu_custom_call.1} parent=1 // pred_region
      _
    $region13: #{tpu_custom_call.1} parent=1 // pred_fallthru
      _
    // Predicated region
    $region14: #{tpu_custom_call.1} parent=1 // pred_check
      _
    $region15: #{tpu_custom_call.1} parent=1 // pred_check_branch
      %41 = sbr.rel (0) target = $region17
    $region16: #{tpu_custom_call.1} parent=1 // pred_region
      %s43 = ssub.s32 4096, 4096
      %44 = vsyncadd [#allocation6], %s43
      %s45 = sshll.u32 [#allocation7], 4
      %s46 = int_to_ptr.vmem [resolvable:$true] %s45
      %51 = dma.hbm_to_vmem [thread:$0]  %s3, 4096, %s46, [#allocation6], 256, 256, 16
    $region17: #{tpu_custom_call.1} parent=1 // pred_fallthru
      _
    // Predicated region
    $region18: #{tpu_custom_call.1} parent=1 // pred_check
      _
    $region19: #{tpu_custom_call.1} parent=1 // pred_check_branch
      %53 = sbr.rel (0) target = $region21
    $region20: #{tpu_custom_call.1} parent=1 // pred_region
      _
    $region21: #{tpu_custom_call.1} parent=1 // pred_fallthru
      _
    // Predicated region
    $region22: #{tpu_custom_call.1} parent=1 // pred_check
      _
    $region23: #{tpu_custom_call.1} parent=1 // pred_check_branch
      %55 = sbr.rel (0) target = $region25
    $region24: #{tpu_custom_call.1} parent=1 // pred_region
      %56 = dma.done [#allocation3], 128
    $region25: #{tpu_custom_call.1} parent=1 // pred_fallthru
      _
    // Predicated region
    $region26: #{tpu_custom_call.1} parent=1 // pred_check
      _
    $region27: #{tpu_custom_call.1} parent=1 // pred_check_branch
      %58 = sbr.rel (0) target = $region29
    $region28: #{tpu_custom_call.1} parent=1 // pred_region
      %59 = dma.done [#allocation6], 256
    $region29: #{tpu_custom_call.1} parent=1 // pred_fallthru
      _
    // Predicated region
    $region30: #{tpu_custom_call.1} parent=1 // pred_check
      _
    $region31: #{tpu_custom_call.1} parent=1 // pred_check_branch
      %61 = sbr.rel (0) target = $region33
    $region32: #{tpu_custom_call.1} parent=1 // pred_region
      %62 = dma.done [#allocation6], 4096
    $region33: #{tpu_custom_call.1} parent=1 // pred_fallthru
      _
    %v63 = vld [vmem:[#allocation2] sm:$0xff]
    %v64 = vld [vmem:[#allocation5] sm:$0xff]
    %v65 = vld [vmem:[#allocation5 + $0x8] sm:$0xff]
    %v66 = vld [vmem:[%s2] sm:$0x1]
    %v68 = vlaneseq
    %v69 = vshrl.u32 %v68, 7
    %v70 = vsub.s32 0, %v69
    %v71 = vrot.slane %v66, %v70
    %vm73 = vcmask 130048
    %v75 = vsel %vm73, %v63, 0
    %77 = vmatprep.subr.mxu0 0.0
    %78 = vmatpush1.msra.mxu0 %v64
    %79 = vmatprep.subr.mxu0 0.0
    %80 = vmatpush1.msra.mxu0 %v65
    %81 = vmatprep.subr.mxu0 0.0
    %82 = vmatpush1.msra.mxu0 0.0
    %83 = vmatprep.subr.mxu0 0.0
    %84 = vmatpush1.msra.mxu0 0.0
    %85 = vmatprep.subr.mxu0 0.0
    %86 = vmatpush1.msra.mxu0 0.0
    %87 = vmatprep.subr.mxu0 0.0
    %88 = vmatpush1.msra.mxu0 0.0
    %89 = vmatprep.subr.mxu0 0.0
    %90 = vmatpush1.msra.mxu0 0.0
    %91 = vmatprep.subr.mxu0 0.0
    %92 = vmatpush1.msra.mxu0 0.0
    %93 = vmatprep.subr.mxu0 0.0
    %94 = vmatpush1.msra.mxu0 0.0
    %95 = vmatprep.subr.mxu0 0.0
    %96 = vmatpush1.msra.mxu0 0.0
    %97 = vmatprep.subr.mxu0 0.0
    %98 = vmatpush1.msra.mxu0 0.0
    %99 = vmatprep.subr.mxu0 0.0
    %100 = vmatpush1.msra.mxu0 0.0
    %101 = vmatprep.subr.mxu0 0.0
    %102 = vmatpush1.msra.mxu0 0.0
    %103 = vmatprep.subr.mxu0 0.0
    %104 = vmatpush1.msra.mxu0 0.0
    %105 = vmatprep.subr.mxu0 0.0
    %106 = vmatpush1.msra.mxu0 0.0
    %107 = vmatprep.subr.mxu0 0.0
    %108 = vmatpush1.msra.mxu0 0.0
    %109 = vmatprep.subr.mxu0 0.0
    %110 = vmatpush1.msra.mxu0 0.0
    %111 = vmatprep.subr.mxu0 0.0
    %112 = vmatpush1.msra.mxu0 0.0
    %113 = vmatprep.subr.mxu0 0.0
    %114 = vmatpush1.msra.mxu0 0.0
    %115 = vmatprep.subr.mxu0 0.0
    %116 = vmatpush1.msra.mxu0 0.0
    %117 = vmatprep.subr.mxu0 0.0
    %118 = vmatpush1.msra.mxu0 0.0
    %119 = vmatprep.subr.mxu0 0.0
    %120 = vmatpush1.msra.mxu0 0.0
    %121 = vmatprep.subr.mxu0 0.0
    %122 = vmatpush1.msra.mxu0 0.0
    %123 = vmatprep.subr.mxu0 0.0
    %124 = vmatpush1.msra.mxu0 0.0
    %125 = vmatprep.subr.mxu0 0.0
    %126 = vmatpush1.msra.mxu0 0.0
    %127 = vmatprep.subr.mxu0 0.0
    %128 = vmatpush1.msra.mxu0 0.0
    %129 = vmatprep.subr.mxu0 0.0
    %130 = vmatpush1.msra.mxu0 0.0
    %131 = vmatprep.subr.mxu0 0.0
    %132 = vmatpush1.msra.mxu0 0.0
    %133 = vmatprep.subr.mxu0 0.0
    %134 = vmatpush1.msra.mxu0 0.0
    %135 = vmatprep.subr.mxu0 0.0
    %136 = vmatpush1.msra.mxu0 0.0
    %137 = vmatprep.subr.mxu0 0.0
    %138 = vmatpush1.msra.mxu0 0.0
    %139 = vmatprep.subr.mxu0 0.0
    %140 = vmatpush1.msra.mxu0 0.0
    %141 = vmatprep.mubr.f32.mxu0 0.0
    %142 = vmatmul.mubr.f32.gmra.mrb[0].mxu0 %v75
    %v143 = vpop.f32.mrb[0].mxu0
    %v144 = vadd.f32 %v71, %v143
    %v145 = vpop.f32.mrb[0].mxu0
    %146 = vdwg.mxu0
    %vm147 = vcmp.ge.f32.partialorder %v144, 0.0
    %v148 = vmul.f32 %v144, 0.01
    %v149 = vsel %vm147, %v144, %v148
    %v150 = vld [vmem:[#allocation7] sm:$0xff]
    %v151 = vld [vmem:[#allocation7 + $0x8] sm:$0xff]
    %v152 = vld [vmem:[#allocation7 + $0x10] sm:$0xff]
    %v153 = vld [vmem:[#allocation7 + $0x18] sm:$0xff]
    %v154 = vld [vmem:[#allocation7 + $0x20] sm:$0xff]
    %v155 = vld [vmem:[#allocation7 + $0x28] sm:$0xff]
    %v156 = vld [vmem:[#allocation7 + $0x30] sm:$0xff]
    %v157 = vld [vmem:[#allocation7 + $0x38] sm:$0xff]
    %v158 = vld [vmem:[#allocation7 + $0x40] sm:$0xff]
    %v159 = vld [vmem:[#allocation7 + $0x48] sm:$0xff]
    %v160 = vld [vmem:[#allocation7 + $0x50] sm:$0xff]
    %v161 = vld [vmem:[#allocation7 + $0x58] sm:$0xff]
    %v162 = vld [vmem:[#allocation7 + $0x60] sm:$0xff]
    %v163 = vld [vmem:[#allocation7 + $0x68] sm:$0xff]
    %v164 = vld [vmem:[#allocation7 + $0x70] sm:$0xff]
    %v165 = vld [vmem:[#allocation7 + $0x78] sm:$0xff]
    %v166 = vld [vmem:[#allocation7 + $0x80] sm:$0xff]
    %v167 = vld [vmem:[#allocation7 + $0x88] sm:$0xff]
    %v168 = vld [vmem:[#allocation7 + $0x90] sm:$0xff]
    %v169 = vld [vmem:[#allocation7 + $0x98] sm:$0xff]
    %v170 = vld [vmem:[#allocation7 + $0xa0] sm:$0xff]
    %v171 = vld [vmem:[#allocation7 + $0xa8] sm:$0xff]
    %v172 = vld [vmem:[#allocation7 + $0xb0] sm:$0xff]
    %v173 = vld [vmem:[#allocation7 + $0xb8] sm:$0xff]
    %v174 = vld [vmem:[#allocation7 + $0xc0] sm:$0xff]
    %v175 = vld [vmem:[#allocation7 + $0xc8] sm:$0xff]
    %v176 = vld [vmem:[#allocation7 + $0xd0] sm:$0xff]
    %v177 = vld [vmem:[#allocation7 + $0xd8] sm:$0xff]
    %v178 = vld [vmem:[#allocation7 + $0xe0] sm:$0xff]
    %v179 = vld [vmem:[#allocation7 + $0xe8] sm:$0xff]
    %v180 = vld [vmem:[#allocation7 + $0xf0] sm:$0xff]
    %v181 = vld [vmem:[#allocation7 + $0xf8] sm:$0xff]
    %v182 = vld [vmem:[%s4] sm:$0x3]
    %v184 = vlaneseq
    %v185 = vshrl.u32 %v184, 7
    %v186 = vsub.s32 0, %v185
    %v187 = vrot.slane %v182, %v186
    %v188 = vlaneseq
    %v189 = vshrl.u32 %v188, 7
    %v190 = vsub.s32 1, %v189
    %v191 = vrot.slane %v182, %v190
    %194 = vmatprep.subr.mxu0 %v151
    %195 = vmatpush1.msra.mxu0 %v150
    %196 = vmatprep.subr.mxu0 %v153
    %197 = vmatpush1.msra.mxu0 %v152
    %198 = vmatprep.subr.mxu0 %v155
    %199 = vmatpush1.msra.mxu0 %v154
    %200 = vmatprep.subr.mxu0 %v157
    %201 = vmatpush1.msra.mxu0 %v156
    %202 = vmatprep.subr.mxu0 %v159
    %203 = vmatpush1.msra.mxu0 %v158
    %204 = vmatprep.subr.mxu0 %v161
    %205 = vmatpush1.msra.mxu0 %v160
    %206 = vmatprep.subr.mxu0 %v163
    %207 = vmatpush1.msra.mxu0 %v162
    %208 = vmatprep.subr.mxu0 %v165
    %209 = vmatpush1.msra.mxu0 %v164
    %210 = vmatprep.subr.mxu0 %v167
    %211 = vmatpush1.msra.mxu0 %v166
    %212 = vmatprep.subr.mxu0 %v169
    %213 = vmatpush1.msra.mxu0 %v168
    %214 = vmatprep.subr.mxu0 %v171
    %215 = vmatpush1.msra.mxu0 %v170
    %216 = vmatprep.subr.mxu0 %v173
    %217 = vmatpush1.msra.mxu0 %v172
    %218 = vmatprep.subr.mxu0 %v175
    %219 = vmatpush1.msra.mxu0 %v174
    %220 = vmatprep.subr.mxu0 %v177
    %221 = vmatpush1.msra.mxu0 %v176
    %222 = vmatprep.subr.mxu0 %v179
    %223 = vmatpush1.msra.mxu0 %v178
    %224 = vmatprep.subr.mxu0 %v181
    %225 = vmatpush1.msra.mxu0 %v180
    %226 = vmatprep.subr.mxu0 0.0
    %227 = vmatpush1.msra.mxu0 0.0
    %228 = vmatprep.subr.mxu0 0.0
    %229 = vmatpush1.msra.mxu0 0.0
    %230 = vmatprep.subr.mxu0 0.0
    %231 = vmatpush1.msra.mxu0 0.0
    %232 = vmatprep.subr.mxu0 0.0
    %233 = vmatpush1.msra.mxu0 0.0
    %234 = vmatprep.subr.mxu0 0.0
    %235 = vmatpush1.msra.mxu0 0.0
    %236 = vmatprep.subr.mxu0 0.0
    %237 = vmatpush1.msra.mxu0 0.0
    %238 = vmatprep.subr.mxu0 0.0
    %239 = vmatpush1.msra.mxu0 0.0
    %240 = vmatprep.subr.mxu0 0.0
    %241 = vmatpush1.msra.mxu0 0.0
    %242 = vmatprep.subr.mxu0 0.0
    %243 = vmatpush1.msra.mxu0 0.0
    %244 = vmatprep.subr.mxu0 0.0
    %245 = vmatpush1.msra.mxu0 0.0
    %246 = vmatprep.subr.mxu0 0.0
    %247 = vmatpush1.msra.mxu0 0.0
    %248 = vmatprep.subr.mxu0 0.0
    %249 = vmatpush1.msra.mxu0 0.0
    %250 = vmatprep.subr.mxu0 0.0
    %251 = vmatpush1.msra.mxu0 0.0
    %252 = vmatprep.subr.mxu0 0.0
    %253 = vmatpush1.msra.mxu0 0.0
    %254 = vmatprep.subr.mxu0 0.0
    %255 = vmatpush1.msra.mxu0 0.0
    %256 = vmatprep.subr.mxu0 0.0
    %257 = vmatpush1.msra.mxu0 0.0
    %258 = vmatprep.mubr.f32.mxu0 0.0
    %259 = vmatmul.mubr.f32.gmra.mrb[0].mxu0 %v149
    %v260 = vpop.f32.mrb[0].mxu0
    %v261 = vadd.f32 %v187, %v260
    %v262 = vpop.f32.mrb[0].mxu0
    %v263 = vadd.f32 %v191, %v262
    %264 = vdwg.mxu0
    %v265 = vtanh.pop %v261
    %266 = vst [vmem:[#allocation8] sm:$0xff] %v265
    %267 = vst [vmem:[#allocation9] sm:$0xff] %v263
    // Predicated region
    $region34: #{tpu_custom_call.1} parent=1 // pred_check
      _
    $region35: #{tpu_custom_call.1} parent=1 // pred_check_branch
      %269 = sbr.rel (0) target = $region37
    $region36: #{tpu_custom_call.1} parent=1 // pred_region
      %s271 = ssub.s32 128, 128
      %272 = vsyncadd [#allocation4], %s271
      %s274 = sshll.u32 [#allocation8], 4
      %s275 = int_to_ptr.vmem [resolvable:$true] %s274
      %277 = dma.vmem_to_hbm [thread:$0]  %s275, 128, %s5, [#allocation4]
    $region37: #{tpu_custom_call.1} parent=1 // pred_fallthru
      _
    // Predicated region
    $region38: #{tpu_custom_call.1} parent=1 // pred_check
      _
    $region39: #{tpu_custom_call.1} parent=1 // pred_check_branch
      %279 = sbr.rel (0) target = $region41
    $region40: #{tpu_custom_call.1} parent=1 // pred_region
      %s281 = ssub.s32 128, 128
      %282 = vsyncadd [#allocation10], %s281
      %s284 = sshll.u32 [#allocation9], 4
      %s285 = int_to_ptr.vmem [resolvable:$true] %s284
      %287 = dma.vmem_to_hbm [thread:$0]  %s285, 128, %s6, [#allocation10]
    $region41: #{tpu_custom_call.1} parent=1 // pred_fallthru
      _
    // Predicated region
    $region42: #{tpu_custom_call.1} parent=1 // pred_check
      _
    $region43: #{tpu_custom_call.1} parent=1 // pred_check_branch
      %289 = sbr.rel (0) target = $region45
    $region44: #{tpu_custom_call.1} parent=1 // pred_region
      %290 = dma.done [#allocation4], 128
    $region45: #{tpu_custom_call.1} parent=1 // pred_fallthru
      _
    // Predicated region
    $region46: #{tpu_custom_call.1} parent=1 // pred_check
      _
    $region47: #{tpu_custom_call.1} parent=1 // pred_check_branch
      %292 = sbr.rel (0) target = $region49
    $region48: #{tpu_custom_call.1} parent=1 // pred_region
      %293 = dma.done [#allocation10], 128
    $region49: #{tpu_custom_call.1} parent=1 // pred_fallthru
      _
    %294 = vsyncpa [#allocation3], 1
    %295 = vsyncpa [#allocation6], 1
    %296 = vsyncpa [#allocation4], 1
    %297 = vsyncpa [#allocation10], 1

</llo_original>
